<compile_context>
chip_gen: v7x
topology: tpu7x:2x2x1
jax: 0.10.0
libtpu: 0.0.40
codegen_flags: <defaults>
</compile_context>

<pallas_src>
import functools
from typing import NamedTuple, Tuple

import jax
import jax.numpy as jnp
from jax.experimental import pallas as pl
from jax.experimental.pallas import tpu as pltpu


# ----------------------------- kernels --------------------------------------


def _cls_copy_kernel(h_ref, o_ref):
    # h_ref: (tb, H) -- token 0's hidden vector per sequence (flat-view fetch).
    o_ref[...] = h_ref[...]


def _cls_slice_kernel(h_ref, o_ref):
    # h_ref: (tb, ts0, H) with ts0 = min(S, 8); take token 0.
    o_ref[...] = h_ref[:, 0, :]


def _masked_avg_kernel(mask_ref, h_ref, o_ref, acc_ref, den_ref, *, seq_len):
    # Grid: (B-tiles, S-tiles); S is the reduction ("arbitrary") axis.
    # mask_ref: (tb, ts, 1), h_ref: (tb, ts, H), o_ref: (tb, H) resident block.
    j = pl.program_id(1)

    @pl.when(j == 0)
    def _():
        acc_ref[...] = jnp.zeros_like(acc_ref)
        den_ref[...] = jnp.zeros_like(den_ref)

    m = mask_ref[...]                                     # (tb, ts, 1), {0,1}
    h = h_ref[...]                                        # (tb, ts, H)
    ts = mask_ref.shape[1]
    if seq_len % ts != 0:
        # Padded S grid: zero out-of-range tail rows (guards against garbage).
        s_idx = jax.lax.broadcasted_iota(jnp.int32, (1, ts, 1), 1) + j * ts
        valid = s_idx < seq_len
        m = jnp.where(valid, m, jnp.zeros_like(m))
        hm = jnp.where(valid, h * m, jnp.zeros_like(h))
    else:
        hm = h * m
    acc_ref[...] += jnp.sum(hm, axis=1, dtype=jnp.float32)   # (tb, H) f32
    den_ref[...] += jnp.sum(m, axis=1, dtype=jnp.float32)    # (tb, 1) f32

    @pl.when(j == pl.num_programs(1) - 1)
    def _():
        inv = pl.reciprocal(den_ref[...], approx=False)       # exact 1/den
        o_ref[...] = (acc_ref[...] * inv).astype(o_ref.dtype)


def _masked_avg2_kernel(mask_ref, h1_ref, h2_ref, o_ref, acc_ref, den_ref, *,
                        seq_len):
    # Masked mean of the average of two layers; the /2 is folded into finalize.
    j = pl.program_id(1)

    @pl.when(j == 0)
    def _():
        acc_ref[...] = jnp.zeros_like(acc_ref)
        den_ref[...] = jnp.zeros_like(den_ref)

    m = mask_ref[...]                                     # (tb, ts, 1), {0,1}
    h = h1_ref[...] + h2_ref[...]                         # (tb, ts, H), in dtype
    ts = mask_ref.shape[1]
    if seq_len % ts != 0:
        s_idx = jax.lax.broadcasted_iota(jnp.int32, (1, ts, 1), 1) + j * ts
        valid = s_idx < seq_len
        m = jnp.where(valid, m, jnp.zeros_like(m))
        hm = jnp.where(valid, h * m, jnp.zeros_like(h))
    else:
        hm = h * m
    acc_ref[...] += jnp.sum(hm, axis=1, dtype=jnp.float32)   # (tb, H) f32
    den_ref[...] += jnp.sum(m, axis=1, dtype=jnp.float32)    # (tb, 1) f32

    @pl.when(j == pl.num_programs(1) - 1)
    def _():
        inv = pl.reciprocal(den_ref[...], approx=False)
        o_ref[...] = (acc_ref[...] * (0.5 * inv)).astype(o_ref.dtype)


# --------------------------- tiling helpers ----------------------------------

_DEFAULT_VMEM_BYTES = 64 * 1024 * 1024   # conservative (v7x) if query fails


def _vmem_budgets():
    """Generation-aware (vmem_limit_bytes, per-step hidden-block budget)."""
    vmem_bytes = _DEFAULT_VMEM_BYTES
    try:
        cap = getattr(pltpu.get_tpu_info(), "vmem_capacity_bytes", None)
        if cap:
            vmem_bytes = int(cap)
    except Exception:
        pass
    # Leave scoped/internal headroom: ~75% of physical, capped at 100 MiB.
    vmem_limit = min((vmem_bytes * 3) // 4, 100 * 1024 * 1024)
    hidden_budget = vmem_limit // 3
    return vmem_limit, hidden_budget


def _batch_tiling(B: int):
    """Return (padded_B, tb).  tb is 8 (with padding if needed) or full B."""
    if B <= 8:
        return B, B
    if B % 8 == 0:
        return B, 8
    Bp = ((B + 7) // 8) * 8
    return Bp, 8


def _seq_tile(S: int, tb: int, H: int, itemsize: int, n_hidden: int,
              hidden_budget: int) -> int:
    """Largest S-tile (multiple of 128, or full S) within the VMEM budget."""
    per_s = 2 * (n_hidden * tb * H + tb) * itemsize   # 2 = double buffer
    max_ts = max(1, hidden_budget // max(per_s, 1))
    if S <= max_ts or S <= 128:
        return S
    ts = (max_ts // 128) * 128
    return max(ts, 128)


# --------------------------- pallas wrappers ---------------------------------


def cls_pool(last_hidden: jax.Array) -> jax.Array:
    B, S, H = last_hidden.shape
    tb = 8 if (B > 8 and B % 8 == 0) else B
    vmem_limit, _ = _vmem_budgets()
    params = pltpu.CompilerParams(dimension_semantics=("parallel",),
                                  vmem_limit_bytes=vmem_limit)
    if H % 128 == 0 or S == 1:
        # Minimal fetch: view (B, S*H); block (tb, H) = exactly token 0.
        flat = last_hidden.reshape(B, S * H)
        return pl.pallas_call(
            _cls_copy_kernel,
            out_shape=jax.ShapeDtypeStruct((B, H), last_hidden.dtype),
            grid=(B // tb,),
            in_specs=[pl.BlockSpec((tb, H), lambda i: (i, 0))],
            out_specs=pl.BlockSpec((tb, H), lambda i: (i, 0)),
            compiler_params=params,
        )(flat)
    # Fallback for lane-unaligned H: fetch first min(S, 8) tokens per sequence.
    ts0 = S if S < 8 else 8
    return pl.pallas_call(
        _cls_slice_kernel,
        out_shape=jax.ShapeDtypeStruct((B, H), last_hidden.dtype),
        grid=(B // tb,),
        in_specs=[pl.BlockSpec((tb, ts0, H), lambda i: (i, 0, 0))],
        out_specs=pl.BlockSpec((tb, H), lambda i: (i, 0)),
        compiler_params=params,
    )(last_hidden)


def _masked_avg_call(attention_mask: jax.Array, hiddens) -> jax.Array:
    n_hidden = len(hiddens)
    h0 = hiddens[0]
    B, S, H = h0.shape
    dtype = h0.dtype
    # Mask to hidden dtype (exact for {0,1}) and (B, S, 1) so its S axis sits
    # on sublanes like the hidden blocks -> cheap lane-splat broadcast.
    mask = attention_mask.astype(dtype).reshape(B, S, 1)

    Bp, tb = _batch_tiling(B)
    if Bp != B:
        # Pad batch to a multiple of 8; padded rows get mask=1 (finite, dropped).
        # TODO(synk): a padded B grid with in-kernel masking would avoid this copy.
        hiddens = tuple(jnp.pad(h, ((0, Bp - B), (0, 0), (0, 0))) for h in hiddens)
        mask = jnp.pad(mask, ((0, Bp - B), (0, 0), (0, 0)), constant_values=1)

    vmem_limit, hidden_budget = _vmem_budgets()
    ts = _seq_tile(S, tb, H, jnp.dtype(dtype).itemsize, n_hidden, hidden_budget)
    grid = (Bp // tb, pl.cdiv(S, ts))

    kernel = _masked_avg2_kernel if n_hidden == 2 else _masked_avg_kernel
    kernel = functools.partial(kernel, seq_len=S)

    in_specs = [pl.BlockSpec((tb, ts, 1), lambda i, j: (i, j, 0))]
    in_specs += [pl.BlockSpec((tb, ts, H), lambda i, j: (i, j, 0))] * n_hidden

    out = pl.pallas_call(
        kernel,
        out_shape=jax.ShapeDtypeStruct((Bp, H), dtype),
        grid=grid,
        in_specs=in_specs,
        out_specs=pl.BlockSpec((tb, H), lambda i, j: (i, 0)),
        scratch_shapes=[pltpu.VMEM((tb, H), jnp.float32),
                        pltpu.VMEM((tb, 1), jnp.float32)],
        compiler_params=pltpu.CompilerParams(
            dimension_semantics=("parallel", "arbitrary"),
            vmem_limit_bytes=vmem_limit),
    )(mask, *hiddens)
    return out[:B] if Bp != B else out


def masked_avg_pool(attention_mask: jax.Array, last_hidden: jax.Array) -> jax.Array:
    return _masked_avg_call(attention_mask, (last_hidden,))


def masked_avg2_pool(attention_mask: jax.Array,
                     hidden_a: jax.Array,
                     hidden_b: jax.Array) -> jax.Array:
    return _masked_avg_call(attention_mask, (hidden_a, hidden_b))


# ------------------------------ module ---------------------------------------


class ModelOutputs(NamedTuple):
    last_hidden_state: jax.Array                 # (B, S, H)
    pooler_output: jax.Array                     # (B, H)  (unused by Pooler)
    hidden_states: Tuple[jax.Array, ...]         # tuple of (B, S, H)


class Pooler:
    """JAX/Pallas port of the parameter-free Pooler (forward-pass only)."""

    def __init__(self, pooler_type: str):
        assert pooler_type in ['cls', 'cls_before_pooler', 'avg',
                               'avg_top2', 'avg_first_last'], \
            'unrecognized pooling type %s' % pooler_type
        self.pooler_type = pooler_type

    def __call__(self, attention_mask: jax.Array, outputs: ModelOutputs) -> jax.Array:
        last_hidden = outputs.last_hidden_state
        hidden_states = outputs.hidden_states
        if self.pooler_type in ['cls_before_pooler', 'cls']:
            return cls_pool(last_hidden)
        elif self.pooler_type == 'avg':
            return masked_avg_pool(attention_mask, last_hidden)
        elif self.pooler_type == 'avg_first_last':
            # Matches the torch module: first_hidden = hidden_states[1]
            return masked_avg2_pool(attention_mask,
                                    hidden_states[1], hidden_states[-1])
        elif self.pooler_type == 'avg_top2':
            return masked_avg2_pool(attention_mask,
                                    hidden_states[-2], hidden_states[-1])
        else:
            raise NotImplementedError


# ------------------------------ reference ------------------------------------


def _ref_pooler(pooler_type, attention_mask, outputs):
    last_hidden = outputs.last_hidden_state
    hidden_states = outputs.hidden_states
    am = attention_mask.astype(jnp.float32)
    if pooler_type in ['cls_before_pooler', 'cls']:
        return last_hidden[:, 0]
    if pooler_type == 'avg':
        return (last_hidden * am[..., None]).sum(1) / am.sum(-1)[..., None]
    if pooler_type == 'avg_first_last':
        h = (hidden_states[1] + hidden_states[-1]) / 2.0
        return (h * am[..., None]).sum(1) / am.sum(-1)[..., None]
    if pooler_type == 'avg_top2':
        h = (hidden_states[-2] + hidden_states[-1]) / 2.0
        return (h * am[..., None]).sum(1) / am.sum(-1)[..., None]
    raise NotImplementedError


# -------------------------------- main ----------------------------------------


if __name__ == "__main__":
    key = jax.random.PRNGKey(0)
    B, S, H = 2, 8, 32
    n_layers = 4  # hidden_states = (embeddings, layer1, layer2, layer3)

    k_hs, k_pool, k_mask = jax.random.split(key, 3)
    hidden_states = tuple(
        jax.random.normal(jax.random.fold_in(k_hs, i), (B, S, H), dtype=jnp.float32)
        for i in range(n_layers)
    )
    last_hidden = hidden_states[-1]
    pooler_output = jax.random.normal(k_pool, (B, H), dtype=jnp.float32)

    # attention mask with some padding (last two tokens of sample 1 masked out)
    attention_mask = jnp.ones((B, S), dtype=jnp.float32)
    attention_mask = attention_mask.at[1, S - 2:].set(0.0)

    outputs = ModelOutputs(last_hidden_state=last_hidden,
                           pooler_output=pooler_output,
                           hidden_states=hidden_states)

    all_ok = True
    for ptype in ['cls', 'cls_before_pooler', 'avg', 'avg_top2', 'avg_first_last']:
        pooler = Pooler(ptype)
        out = pooler(attention_mask, outputs)
        out = jax.block_until_ready(out)
        ref = _ref_pooler(ptype, attention_mask, outputs)
        if not jnp.allclose(out, ref, atol=1e-5, rtol=1e-5):
            all_ok = False
            print(f"MISMATCH for pooler_type={ptype}")

    if all_ok:
        print("KERNEL_OK")
</pallas_src>

<mosaic_0001>
module attributes {stable_mosaic.version = 11 : i64} {
  func.func @_cls_slice_kernel(%arg0: i32, %arg1: memref<2x8x32xf32, #tpu.memory_space<vmem>>, %arg2: memref<2x32xf32, #tpu.memory_space<vmem>>) attributes {dimension_semantics = [#tpu.dimension_semantics<parallel>], iteration_bounds = array<i64: 1>, scalar_prefetch = 0 : i64, scratch_operands = 0 : i64, tpu.core_type = #tpu.core_type<tc>, window_params = [{transform_indices = @transform_0, window_bounds = array<i64: 2, 8, 32>}, {transform_indices = @transform_1, window_bounds = array<i64: 2, 32>}]} {
    %c0 = arith.constant 0 : index
    %c0_0 = arith.constant 0 : index
    %c0_1 = arith.constant 0 : index
    %0 = vector.load %arg1[%c0, %c0_0, %c0_1] : memref<2x8x32xf32, #tpu.memory_space<vmem>>, vector<2x1x32xf32>
    %1 = vector.shape_cast %0 : vector<2x1x32xf32> to vector<2x32xf32>
    %c0_2 = arith.constant 0 : index
    %c0_3 = arith.constant 0 : index
    %2 = vector.load %arg2[%c0_2, %c0_3] : memref<2x32xf32, #tpu.memory_space<vmem>>, vector<2x32xf32>
    tpu.vector_store %arg2[%c0_2, %c0_3], %1 {strides = array<i32>} : memref<2x32xf32, #tpu.memory_space<vmem>>, vector<2x32xf32>,
    return
  }
  func.func @transform_0(%arg0: i32) -> (i32, i32, i32) {
    %c0_i32 = arith.constant 0 : i32
    %c0_i32_0 = arith.constant 0 : i32
    %c0_i32_1 = arith.constant 0 : i32
    return %arg0, %c0_i32, %c0_i32_0 : i32, i32, i32
  }
  func.func @transform_1(%arg0: i32) -> (i32, i32) {
    %c0_i32 = arith.constant 0 : i32
    %c0_i32_0 = arith.constant 0 : i32
    return %arg0, %c0_i32 : i32, i32
  }
}

</mosaic_0001>

<llo_original>
// kernel: tpu_custom_call.1
$region0: #{tpu_custom_call.1}
  #allocation0 [shape = 'u32[]', space=smem, size = 0x4, offset = 0x4, fixed_abs, tag = 'smem constant byte address 0x4 - core index']
  #allocation1 [shape = 'u32[144,128]{1,0:T(1,128)}', space=vmem, size = 0x12000, scoped, tag = 'internal scratch']
  %s0 = inlined_call_operand.hbm [shape: f32[2,8,32], index: 0, kind: input, shape index: {}]
  %s1 = inlined_call_operand.hbm [shape: f32[2,32], index: 1, kind: output, shape index: {}]
  %s2 = sld [smem:[#allocation0]]
  $region18: #{tpu_custom_call.1} parent=0
    _
  %s4 = ssub.s32 1, %s2
  %s5 = scalar_select 0, %s4, %s2
  $region1: #{tpu_custom_call.1} parent=0
    #allocation2 [shape = 'u8[8192]{0}', space=vmem, size = 0x2000, scoped, tag = 'input window, operand 0, single buffered']
    #allocation3 [shape = 's32[1]{0}', space=sflag, size = 0x4, scoped, tag = 'scoped memory for tpu_custom_call.1']
    #allocation4 [shape = 's32[1]{0}', space=sflag, size = 0x4, scoped, tag = 'scoped memory for tpu_custom_call.1']
    #allocation5 [shape = 'u8[1024]{0}', space=vmem, size = 0x400, scoped, tag = 'output window, operand 0, single buffered']
    %6 = vsyncpa [#allocation3], 0
    %7 = vsyncpa [#allocation4], 0
    // Predicated region
    $region2: #{tpu_custom_call.1} parent=1 // pred_check
      _
    $region3: #{tpu_custom_call.1} parent=1 // pred_check_branch
      %9 = sbr.rel (0) target = $region5
    $region4: #{tpu_custom_call.1} parent=1 // pred_region
      %s11 = ssub.s32 256, 256
      %12 = vsyncadd [#allocation3], %s11
      %s13 = sshll.u32 [#allocation2], 4
      %s14 = int_to_ptr.vmem [resolvable:$true] %s13
      %19 = dma.hbm_to_vmem [thread:$0]  %s0, 256, %s14, [#allocation3], 128, 128, 8
    $region5: #{tpu_custom_call.1} parent=1 // pred_fallthru
      _
    // Predicated region
    $region6: #{tpu_custom_call.1} parent=1 // pred_check
      _
    $region7: #{tpu_custom_call.1} parent=1 // pred_check_branch
      %21 = sbr.rel (0) target = $region9
    $region8: #{tpu_custom_call.1} parent=1 // pred_region
      %22 = dma.done [#allocation3], 256
    $region9: #{tpu_custom_call.1} parent=1 // pred_fallthru
      _
    %v23 = vld [vmem:[#allocation2] sm:$0x1]
    %v24 = vld [vmem:[#allocation2 + $0x8] sm:$0x1]
    %v27 = vrot.slane %v24, 7
    %vm28 = vcmask 1041409
    %v29 = vsel %vm28, %v27, %v23
    %vm31 = vcmask 254976
    %32 = vst.msk [vmem:[#allocation5] sm:$0x3] %vm31, %v29
    // Predicated region
    $region10: #{tpu_custom_call.1} parent=1 // pred_check
      _
    $region11: #{tpu_custom_call.1} parent=1 // pred_check_branch
      %34 = sbr.rel (0) target = $region13
    $region12: #{tpu_custom_call.1} parent=1 // pred_region
      %s36 = ssub.s32 32, 32
      %37 = vsyncadd [#allocation4], %s36
      %s39 = sshll.u32 [#allocation5], 4
      %s40 = int_to_ptr.vmem [resolvable:$true] %s39
      %42 = dma.vmem_to_hbm [thread:$0]  %s40, 32, %s1, [#allocation4]
    $region13: #{tpu_custom_call.1} parent=1 // pred_fallthru
      _
    // Predicated region
    $region14: #{tpu_custom_call.1} parent=1 // pred_check
      _
    $region15: #{tpu_custom_call.1} parent=1 // pred_check_branch
      %44 = sbr.rel (0) target = $region17
    $region16: #{tpu_custom_call.1} parent=1 // pred_region
      %45 = dma.done [#allocation4], 32
    $region17: #{tpu_custom_call.1} parent=1 // pred_fallthru
      _
    %46 = vsyncpa [#allocation3], 1
    %47 = vsyncpa [#allocation4], 1

</llo_original>
